<compile_context>
chip_gen: v6e
topology: v6e:2x2x1
jax: 0.10.0
libtpu: 0.0.40
codegen_flags: <defaults>
</compile_context>

<pallas_src>
import functools

import jax
import jax.numpy as jnp
from jax.experimental import pallas as pl
from jax.experimental.pallas import tpu as pltpu

HIDDEN = 128


def _critic_kernel(x_ref, w1_ref, b1_ref, w2_ref, b2_ref, w3_ref, b3_ref,
                   o_ref, *, use_bf16):
    x = x_ref[...]                                           # (TB, D) f32
    w1 = w1_ref[...]
    w2 = w2_ref[...]

    if use_bf16:
        # MXU-only bf16: keep all VPU work (bias add / ReLU / reduction) in f32.
        x = x.astype(jnp.bfloat16)
        w1 = w1.astype(jnp.bfloat16)
        w2 = w2.astype(jnp.bfloat16)

    h1 = jnp.dot(x, w1, preferred_element_type=jnp.float32)      # MXU
    h1 = jnp.maximum(h1 + b1_ref[...], 0.0)                      # (TB, 128) f32

    h1_mx = h1.astype(jnp.bfloat16) if use_bf16 else h1
    h2 = jnp.dot(h1_mx, w2, preferred_element_type=jnp.float32)  # MXU
    h2 = jnp.maximum(h2 + b2_ref[...], 0.0)                      # (TB, 128) f32

    # N=1 output head: VPU multiply + lane reduction instead of MXU matmul.
    out = jnp.sum(h2 * w3_ref[...], axis=-1, keepdims=True) + b3_ref[...]
    o_ref[...] = out.astype(o_ref.dtype)                         # (TB, 1)


def critic_forward(obs, params, *, block_b=1024, use_bf16=False):
    """obs: (B, ...) float32, flattened to (B, state_dim).
    params: dict of w1,b1,w2,b2,w3,b3 with w stored as (in, out)."""
    obs = jnp.asarray(obs, jnp.float32)
    B = obs.shape[0]
    obs = obs.reshape(B, -1)
    D = obs.shape[1]

    w1, b1 = params["w1"], params["b1"]
    w2, b2 = params["w2"], params["b2"]
    w3, b3 = params["w3"], params["b3"]
    w3_row = w3.reshape(1, HIDDEN)          # (1, 128) row for the VPU reduction
    b3 = b3.reshape(1, 1)

    # Batch tile: multiple of 8 (f32 sublanes), capped by the padded batch.
    padded_b = ((B + 7) // 8) * 8
    tb = min(block_b, padded_b)
    tb = max(8, (tb // 8) * 8)
    grid = (pl.cdiv(B, tb),)

    const2 = lambda i: (0, 0)               # weights/biases resident in VMEM

    flops = 2 * B * (D * HIDDEN + HIDDEN * HIDDEN + HIDDEN)
    bytes_accessed = (obs.size + w1.size + b1.size + w2.size + b2.size
                      + w3.size + b3.size + B) * 4
    cost = pl.CostEstimate(flops=flops, transcendentals=0,
                           bytes_accessed=bytes_accessed)

    kernel = functools.partial(_critic_kernel, use_bf16=use_bf16)

    return pl.pallas_call(
        kernel,
        out_shape=jax.ShapeDtypeStruct((B, 1), jnp.float32),
        grid=grid,
        in_specs=[
            pl.BlockSpec((tb, D), lambda i: (i, 0)),         # obs: streamed
            pl.BlockSpec(w1.shape, const2),                  # (D, 128)
            pl.BlockSpec(b1.shape, const2),                  # (1, 128)
            pl.BlockSpec(w2.shape, const2),                  # (128, 128)
            pl.BlockSpec(b2.shape, const2),                  # (1, 128)
            pl.BlockSpec(w3_row.shape, const2),              # (1, 128)
            pl.BlockSpec(b3.shape, const2),                  # (1, 1)
        ],
        out_specs=pl.BlockSpec((tb, 1), lambda i: (i, 0)),
        compiler_params=pltpu.CompilerParams(
            dimension_semantics=("parallel",),               # v7x dual-TC
        ),
        cost_estimate=cost,
    )(obs, w1, b1, w2, b2, w3_row, b3)


def init_params(key, state_dim, hidden=HIDDEN):
    """Deterministic synthetic parameters (shapes match the PyTorch module)."""
    k1, k2, k3, k4, k5, k6 = jax.random.split(key, 6)
    s1 = 1.0 / jnp.sqrt(state_dim)
    s2 = 1.0 / jnp.sqrt(hidden)
    return {
        # stored as (in, out) == transpose of torch's (out, in)
        "w1": jax.random.uniform(k1, (state_dim, hidden), jnp.float32, -s1, s1),
        "b1": jax.random.uniform(k2, (1, hidden), jnp.float32, -s1, s1),
        "w2": jax.random.uniform(k3, (hidden, hidden), jnp.float32, -s2, s2),
        "b2": jax.random.uniform(k4, (1, hidden), jnp.float32, -s2, s2),
        "w3": jax.random.uniform(k5, (hidden, 1), jnp.float32, -s2, s2),
        "b3": jax.random.uniform(k6, (1, 1), jnp.float32, -s2, s2),
    }


def critic_reference(obs, params):
    """Pure-JAX reference of the PyTorch forward pass."""
    obs = obs.reshape(obs.shape[0], -1)
    h1 = jnp.maximum(obs @ params["w1"] + params["b1"], 0.0)
    h2 = jnp.maximum(h1 @ params["w2"] + params["b2"], 0.0)
    return h2 @ params["w3"] + params["b3"]


if __name__ == "__main__":
    key = jax.random.PRNGKey(0)
    k_obs, k_par = jax.random.split(key)

    batch = 8
    state_dim = 32          # state_shape = (32,)  ->  np.prod(state_shape) = 32

    obs = jax.random.normal(k_obs, (batch, state_dim), dtype=jnp.float32)
    params = init_params(k_par, state_dim)

    out = critic_forward(obs, params)                 # f32 path (exact check)
    out = jax.block_until_ready(out)

    ref = critic_reference(obs, params)
    assert out.shape == (batch, 1)
    assert jnp.allclose(out, ref, atol=1e-5, rtol=1e-5), "mismatch vs reference"

    # Also exercise the tiled path (B > TB) to verify multi-step grid + padding.
    big_b = 2056            # not a multiple of the 1024-row tile on purpose
    obs_big = jax.random.normal(k_obs, (big_b, state_dim), dtype=jnp.float32)
    out_big = jax.block_until_ready(critic_forward(obs_big, params))
    ref_big = critic_reference(obs_big, params)
    assert out_big.shape == (big_b, 1)
    assert jnp.allclose(out_big, ref_big, atol=1e-4, rtol=1e-4), "tiled mismatch"

    print("KERNEL_OK")
</pallas_src>

<mosaic_0001>
module attributes {stable_mosaic.version = 11 : i64} {
  func.func @_critic_kernel(%arg0: i32, %arg1: memref<8x32xf32, #tpu.memory_space<vmem>>, %arg2: memref<32x128xf32, #tpu.memory_space<vmem>>, %arg3: memref<1x128xf32, #tpu.memory_space<vmem>>, %arg4: memref<128x128xf32, #tpu.memory_space<vmem>>, %arg5: memref<1x128xf32, #tpu.memory_space<vmem>>, %arg6: memref<1x128xf32, #tpu.memory_space<vmem>>, %arg7: memref<1x1xf32, #tpu.memory_space<vmem>>, %arg8: memref<8x1xf32, #tpu.memory_space<vmem>>) attributes {dimension_semantics = [#tpu.dimension_semantics<parallel>], iteration_bounds = array<i64: 1>, scalar_prefetch = 0 : i64, scratch_operands = 0 : i64, tpu.core_type = #tpu.core_type<tc>, window_params = [{transform_indices = @transform_0, window_bounds = array<i64: 8, 32>}, {pipeline_mode = #tpu.pipeline_mode<synchronous>, transform_indices = @transform_1, window_bounds = array<i64: 32, 128>}, {pipeline_mode = #tpu.pipeline_mode<synchronous>, transform_indices = @transform_2, window_bounds = array<i64: 1, 128>}, {pipeline_mode = #tpu.pipeline_mode<synchronous>, transform_indices = @transform_3, window_bounds = array<i64: 128, 128>}, {pipeline_mode = #tpu.pipeline_mode<synchronous>, transform_indices = @transform_4, window_bounds = array<i64: 1, 128>}, {pipeline_mode = #tpu.pipeline_mode<synchronous>, transform_indices = @transform_5, window_bounds = array<i64: 1, 128>}, {pipeline_mode = #tpu.pipeline_mode<synchronous>, transform_indices = @transform_6, window_bounds = array<i64: 1, 1>}, {transform_indices = @transform_7, window_bounds = array<i64: 8, 1>}]} {
    %c0 = arith.constant 0 : index
    %c0_0 = arith.constant 0 : index
    %0 = vector.load %arg1[%c0, %c0_0] : memref<8x32xf32, #tpu.memory_space<vmem>>, vector<8x32xf32>
    %c0_1 = arith.constant 0 : index
    %c0_2 = arith.constant 0 : index
    %1 = vector.load %arg2[%c0_1, %c0_2] : memref<32x128xf32, #tpu.memory_space<vmem>>, vector<32x128xf32>
    %c0_3 = arith.constant 0 : index
    %c0_4 = arith.constant 0 : index
    %2 = vector.load %arg4[%c0_3, %c0_4] : memref<128x128xf32, #tpu.memory_space<vmem>>, vector<128x128xf32>
    %cst = arith.constant dense<0.000000e+00> : vector<8x128xf32>
    %3 = tpu.matmul %0, %1, %cst {dimension_numbers = #tpu.dot_dimension_numbers<[1], [0], [0], [1], [0, 0, 1, 1], [], []>} : vector<8x32xf32>, vector<32x128xf32>, vector<8x128xf32> -> vector<8x128xf32>
    %c0_5 = arith.constant 0 : index
    %c0_6 = arith.constant 0 : index
    %4 = vector.load %arg3[%c0_5, %c0_6] : memref<1x128xf32, #tpu.memory_space<vmem>>, vector<1x128xf32>
    %5 = vector.broadcast %4 : vector<1x128xf32> to vector<8x128xf32>
    %6 = arith.addf %3, %5 : vector<8x128xf32>
    %cst_7 = arith.constant 0.000000e+00 : f32
    %7 = vector.broadcast %cst_7 : f32 to vector<8x128xf32>
    %8 = arith.maximumf %6, %7 : vector<8x128xf32>
    %cst_8 = arith.constant dense<0.000000e+00> : vector<8x128xf32>
    %9 = tpu.matmul %8, %2, %cst_8 {dimension_numbers = #tpu.dot_dimension_numbers<[1], [0], [0], [1], [0, 0, 1, 1], [], []>} : vector<8x128xf32>, vector<128x128xf32>, vector<8x128xf32> -> vector<8x128xf32>
    %c0_9 = arith.constant 0 : index
    %c0_10 = arith.constant 0 : index
    %10 = vector.load %arg5[%c0_9, %c0_10] : memref<1x128xf32, #tpu.memory_space<vmem>>, vector<1x128xf32>
    %11 = vector.broadcast %10 : vector<1x128xf32> to vector<8x128xf32>
    %12 = arith.addf %9, %11 : vector<8x128xf32>
    %cst_11 = arith.constant 0.000000e+00 : f32
    %13 = vector.broadcast %cst_11 : f32 to vector<8x128xf32>
    %14 = arith.maximumf %12, %13 : vector<8x128xf32>
    %c0_12 = arith.constant 0 : index
    %c0_13 = arith.constant 0 : index
    %15 = vector.load %arg6[%c0_12, %c0_13] : memref<1x128xf32, #tpu.memory_space<vmem>>, vector<1x128xf32>
    %16 = vector.broadcast %15 : vector<1x128xf32> to vector<8x128xf32>
    %17 = arith.mulf %14, %16 : vector<8x128xf32>
    %cst_14 = arith.constant dense<0.000000e+00> : vector<8xf32>
    %18 = vector.multi_reduction <add>, %17, %cst_14 [1] : vector<8x128xf32> to vector<8xf32>
    %19 = vector.shape_cast %18 : vector<8xf32> to vector<8x1xf32>
    %c0_15 = arith.constant 0 : index
    %c0_16 = arith.constant 0 : index
    %20 = vector.load %arg7[%c0_15, %c0_16] : memref<1x1xf32, #tpu.memory_space<vmem>>, vector<1x1xf32>
    %21 = vector.broadcast %20 : vector<1x1xf32> to vector<8x1xf32>
    %22 = arith.addf %19, %21 : vector<8x1xf32>
    %c0_17 = arith.constant 0 : index
    %c0_18 = arith.constant 0 : index
    %23 = vector.load %arg8[%c0_17, %c0_18] : memref<8x1xf32, #tpu.memory_space<vmem>>, vector<8x1xf32>
    tpu.vector_store %arg8[%c0_17, %c0_18], %22 {strides = array<i32>} : memref<8x1xf32, #tpu.memory_space<vmem>>, vector<8x1xf32>,
    return
  }
  func.func @transform_0(%arg0: i32) -> (i32, i32) {
    %c0_i32 = arith.constant 0 : i32
    %c0_i32_0 = arith.constant 0 : i32
    return %arg0, %c0_i32 : i32, i32
  }
  func.func @transform_1(%arg0: i32) -> (i32, i32) {
    %c0_i32 = arith.constant 0 : i32
    %c0_i32_0 = arith.constant 0 : i32
    %c0_i32_1 = arith.constant 0 : i32
    return %c0_i32, %c0_i32_0 : i32, i32
  }
  func.func @transform_2(%arg0: i32) -> (i32, i32) {
    %c0_i32 = arith.constant 0 : i32
    %c0_i32_0 = arith.constant 0 : i32
    %c0_i32_1 = arith.constant 0 : i32
    return %c0_i32, %c0_i32_0 : i32, i32
  }
  func.func @transform_3(%arg0: i32) -> (i32, i32) {
    %c0_i32 = arith.constant 0 : i32
    %c0_i32_0 = arith.constant 0 : i32
    %c0_i32_1 = arith.constant 0 : i32
    return %c0_i32, %c0_i32_0 : i32, i32
  }
  func.func @transform_4(%arg0: i32) -> (i32, i32) {
    %c0_i32 = arith.constant 0 : i32
    %c0_i32_0 = arith.constant 0 : i32
    %c0_i32_1 = arith.constant 0 : i32
    return %c0_i32, %c0_i32_0 : i32, i32
  }
  func.func @transform_5(%arg0: i32) -> (i32, i32) {
    %c0_i32 = arith.constant 0 : i32
    %c0_i32_0 = arith.constant 0 : i32
    %c0_i32_1 = arith.constant 0 : i32
    return %c0_i32, %c0_i32_0 : i32, i32
  }
  func.func @transform_6(%arg0: i32) -> (i32, i32) {
    %c0_i32 = arith.constant 0 : i32
    %c0_i32_0 = arith.constant 0 : i32
    %c0_i32_1 = arith.constant 0 : i32
    return %c0_i32, %c0_i32_0 : i32, i32
  }
  func.func @transform_7(%arg0: i32) -> (i32, i32) {
    %c0_i32 = arith.constant 0 : i32
    %c0_i32_0 = arith.constant 0 : i32
    return %arg0, %c0_i32 : i32, i32
  }
}

</mosaic_0001>

<llo_original>
// kernel: tpu_custom_call.1
$region0: #{tpu_custom_call.1}
  #allocation0 [shape = 'u32[]', space=smem, size = 0x4, offset = 0x4, fixed_abs, tag = 'smem constant byte address 0x4 - core index']
  #allocation1 [shape = 'u32[144,128]{1,0:T(1,128)}', space=vmem, size = 0x12000, scoped, tag = 'internal scratch']
  #allocation2 [shape = 'f32[1,1]{1,0:T(1,128)S(1)}', space=vmem, size = 0x200, scoped, tag = 'scoped memory for tpu_custom_call.1']
  %s0 = inlined_call_operand.hbm [shape: f32[8,32], index: 0, kind: input, shape index: {}]
  %s1 = inlined_call_operand.hbm [shape: f32[32,128], index: 1, kind: input, shape index: {}]
  %s2 = inlined_call_operand.vmem [shape: f32[1,128], index: 2, kind: input, shape index: {}]
  %s3 = inlined_call_operand.hbm [shape: f32[128,128], index: 3, kind: input, shape index: {}]
  %s4 = inlined_call_operand.vmem [shape: f32[1,128], index: 4, kind: input, shape index: {}]
  %s5 = inlined_call_operand.vmem [shape: f32[1,128], index: 5, kind: input, shape index: {}]
  %s6 = inlined_call_operand.<no memory space> [shape: f32[1,1], index: 6, kind: input, shape index: {}]
  %s7 = inlined_call_operand.vmem [shape: f32[8,1], index: 7, kind: output, shape index: {}]
  %s8 = sld [smem:[#allocation0]]
  $region50: #{tpu_custom_call.1} parent=0
    _
  %s10 = ssub.s32 1, %s8
  %s11 = scalar_select 0, %s10, %s8
  %v12 = vstv %s6
  %13 = vst [vmem:[#allocation2] sm:$0x1] %v12
  $region1: #{tpu_custom_call.1} parent=0
    #allocation3 [shape = 'u8[4096]{0}', space=vmem, size = 0x1000, scoped, tag = 'input window, operand 0, single buffered']
    #allocation4 [shape = 's32[1]{0}', space=sflag, size = 0x4, scoped, tag = 'scoped memory for tpu_custom_call.1']
    #allocation5 [shape = 'u8[16384]{0}', space=vmem, size = 0x4000, scoped, tag = 'input window, operand 1, single buffered']
    #allocation6 [shape = 's32[1]{0}', space=sflag, size = 0x4, scoped, tag = 'scoped memory for tpu_custom_call.1']
    #allocation7 [shape = 'u8[65536]{0}', space=vmem, size = 0x10000, scoped, tag = 'input window, operand 3, single buffered']
    %14 = vsyncpa [#allocation4], 0
    %15 = vsyncpa [#allocation6], 0
    // Predicated region
    $region2: #{tpu_custom_call.1} parent=1 // pred_check
      _
    $region3: #{tpu_custom_call.1} parent=1 // pred_check_branch
      %17 = sbr.rel (0) target = $region5
    $region4: #{tpu_custom_call.1} parent=1 // pred_region
      %s19 = ssub.s32 128, 128
      %20 = vsyncadd [#allocation4], %s19
      %s22 = sshll.u32 [#allocation3], 4
      %s23 = int_to_ptr.vmem [resolvable:$true] %s22
      %25 = dma.hbm_to_vmem [thread:$0]  %s0, 128, %s23, [#allocation4]
    $region5: #{tpu_custom_call.1} parent=1 // pred_fallthru
      _
    // Predicated region
    $region6: #{tpu_custom_call.1} parent=1 // pred_check
      _
    $region7: #{tpu_custom_call.1} parent=1 // pred_check_branch
      %27 = sbr.rel (0) target = $region9
    $region8: #{tpu_custom_call.1} parent=1 // pred_region
      %s29 = ssub.s32 512, 512
      %30 = vsyncadd [#allocation6], %s29
      %s31 = sshll.u32 [#allocation5], 4
      %s32 = int_to_ptr.vmem [resolvable:$true] %s31
      %37 = dma.hbm_to_vmem [thread:$0]  %s1, 512, %s32, [#allocation6], 128, 128, 8
    $region9: #{tpu_custom_call.1} parent=1 // pred_fallthru
      _
    // Predicated region
    $region10: #{tpu_custom_call.1} parent=1 // pred_check
      _
    $region11: #{tpu_custom_call.1} parent=1 // pred_check_branch
      %39 = sbr.rel (0) target = $region13
    $region12: #{tpu_custom_call.1} parent=1 // pred_region
      _
    $region13: #{tpu_custom_call.1} parent=1 // pred_fallthru
      _
    // Predicated region
    $region14: #{tpu_custom_call.1} parent=1 // pred_check
      _
    $region15: #{tpu_custom_call.1} parent=1 // pred_check_branch
      %41 = sbr.rel (0) target = $region17
    $region16: #{tpu_custom_call.1} parent=1 // pred_region
      %s43 = ssub.s32 2048, 2048
      %44 = vsyncadd [#allocation6], %s43
      %s45 = sshll.u32 [#allocation7], 4
      %s46 = int_to_ptr.vmem [resolvable:$true] %s45
      %51 = dma.hbm_to_vmem [thread:$0]  %s3, 2048, %s46, [#allocation6], 128, 128, 8
    $region17: #{tpu_custom_call.1} parent=1 // pred_fallthru
      _
    // Predicated region
    $region18: #{tpu_custom_call.1} parent=1 // pred_check
      _
    $region19: #{tpu_custom_call.1} parent=1 // pred_check_branch
      %53 = sbr.rel (0) target = $region21
    $region20: #{tpu_custom_call.1} parent=1 // pred_region
      _
    $region21: #{tpu_custom_call.1} parent=1 // pred_fallthru
      _
    // Predicated region
    $region22: #{tpu_custom_call.1} parent=1 // pred_check
      _
    $region23: #{tpu_custom_call.1} parent=1 // pred_check_branch
      %55 = sbr.rel (0) target = $region25
    $region24: #{tpu_custom_call.1} parent=1 // pred_region
      _
    $region25: #{tpu_custom_call.1} parent=1 // pred_fallthru
      _
    // Predicated region
    $region26: #{tpu_custom_call.1} parent=1 // pred_check
      _
    $region27: #{tpu_custom_call.1} parent=1 // pred_check_branch
      %57 = sbr.rel (0) target = $region29
    $region28: #{tpu_custom_call.1} parent=1 // pred_region
      _
    $region29: #{tpu_custom_call.1} parent=1 // pred_fallthru
      _
    // Predicated region
    $region30: #{tpu_custom_call.1} parent=1 // pred_check
      _
    $region31: #{tpu_custom_call.1} parent=1 // pred_check_branch
      %59 = sbr.rel (0) target = $region33
    $region32: #{tpu_custom_call.1} parent=1 // pred_region
      %60 = dma.done [#allocation4], 128
    $region33: #{tpu_custom_call.1} parent=1 // pred_fallthru
      _
    // Predicated region
    $region34: #{tpu_custom_call.1} parent=1 // pred_check
      _
    $region35: #{tpu_custom_call.1} parent=1 // pred_check_branch
      %62 = sbr.rel (0) target = $region37
    $region36: #{tpu_custom_call.1} parent=1 // pred_region
      %63 = dma.done [#allocation6], 512
    $region37: #{tpu_custom_call.1} parent=1 // pred_fallthru
      _
    // Predicated region
    $region38: #{tpu_custom_call.1} parent=1 // pred_check
      _
    $region39: #{tpu_custom_call.1} parent=1 // pred_check_branch
      %65 = sbr.rel (0) target = $region41
    $region40: #{tpu_custom_call.1} parent=1 // pred_region
      %66 = dma.done [#allocation6], 2048
    $region41: #{tpu_custom_call.1} parent=1 // pred_fallthru
      _
    %v67 = vld [vmem:[#allocation3] sm:$0xff]
    %v68 = vld [vmem:[#allocation5] sm:$0xff]
    %v69 = vld [vmem:[#allocation5 + $0x8] sm:$0xff]
    %v70 = vld [vmem:[#allocation5 + $0x10] sm:$0xff]
    %v71 = vld [vmem:[#allocation5 + $0x18] sm:$0xff]
    %v72 = vld [vmem:[#allocation7] sm:$0xff]
    %v73 = vld [vmem:[#allocation7 + $0x8] sm:$0xff]
    %v74 = vld [vmem:[#allocation7 + $0x10] sm:$0xff]
    %v75 = vld [vmem:[#allocation7 + $0x18] sm:$0xff]
    %v76 = vld [vmem:[#allocation7 + $0x20] sm:$0xff]
    %v77 = vld [vmem:[#allocation7 + $0x28] sm:$0xff]
    %v78 = vld [vmem:[#allocation7 + $0x30] sm:$0xff]
    %v79 = vld [vmem:[#allocation7 + $0x38] sm:$0xff]
    %v80 = vld [vmem:[#allocation7 + $0x40] sm:$0xff]
    %v81 = vld [vmem:[#allocation7 + $0x48] sm:$0xff]
    %v82 = vld [vmem:[#allocation7 + $0x50] sm:$0xff]
    %v83 = vld [vmem:[#allocation7 + $0x58] sm:$0xff]
    %v84 = vld [vmem:[#allocation7 + $0x60] sm:$0xff]
    %v85 = vld [vmem:[#allocation7 + $0x68] sm:$0xff]
    %v86 = vld [vmem:[#allocation7 + $0x70] sm:$0xff]
    %v87 = vld [vmem:[#allocation7 + $0x78] sm:$0xff]
    %v88 = vld [vmem:[%s2] sm:$0x1]
    %v90 = vlaneseq
    %v91 = vshrl.u32 %v90, 7
    %v92 = vsub.s32 0, %v91
    %v93 = vrot.slane %v88, %v92
    %vm95 = vcmask 261120
    %v97 = vsel %vm95, %v67, 0
    %99 = vmatprep.subr.mxu0 0.0
    %100 = vmatpush1.msra.mxu0 0.0
    %101 = vmatprep.subr.mxu0 0.0
    %102 = vmatpush1.msra.mxu0 0.0
    %103 = vmatprep.subr.mxu0 0.0
    %104 = vmatpush1.msra.mxu0 0.0
    %105 = vmatprep.subr.mxu0 0.0
    %106 = vmatpush1.msra.mxu0 0.0
    %107 = vmatprep.subr.mxu0 0.0
    %108 = vmatpush1.msra.mxu0 0.0
    %109 = vmatprep.subr.mxu0 0.0
    %110 = vmatpush1.msra.mxu0 0.0
    %111 = vmatprep.subr.mxu0 0.0
    %112 = vmatpush1.msra.mxu0 0.0
    %113 = vmatprep.subr.mxu0 0.0
    %114 = vmatpush1.msra.mxu0 0.0
    %115 = vmatprep.subr.mxu0 0.0
    %116 = vmatpush1.msra.mxu0 0.0
    %117 = vmatprep.subr.mxu0 0.0
    %118 = vmatpush1.msra.mxu0 0.0
    %119 = vmatprep.subr.mxu0 0.0
    %120 = vmatpush1.msra.mxu0 0.0
    %121 = vmatprep.subr.mxu0 0.0
    %122 = vmatpush1.msra.mxu0 0.0
    %123 = vmatprep.subr.mxu0 0.0
    %124 = vmatpush1.msra.mxu0 %v71
    %125 = vmatprep.subr.mxu0 0.0
    %126 = vmatpush1.msra.mxu0 %v70
    %127 = vmatprep.subr.mxu0 0.0
    %128 = vmatpush1.msra.mxu0 %v69
    %129 = vmatprep.subr.mxu0 0.0
    %130 = vmatpush1.msra.mxu0 %v68
    %131 = vmatprep.subr.mxu0 0.0
    %132 = vmatpush2.msra.mxu0 0.0
    %133 = vmatprep.subr.mxu0 0.0
    %134 = vmatpush2.msra.mxu0 0.0
    %135 = vmatprep.subr.mxu0 0.0
    %136 = vmatpush2.msra.mxu0 0.0
    %137 = vmatprep.subr.mxu0 0.0
    %138 = vmatpush2.msra.mxu0 0.0
    %139 = vmatprep.subr.mxu0 0.0
    %140 = vmatpush2.msra.mxu0 0.0
    %141 = vmatprep.subr.mxu0 0.0
    %142 = vmatpush2.msra.mxu0 0.0
    %143 = vmatprep.subr.mxu0 0.0
    %144 = vmatpush2.msra.mxu0 0.0
    %145 = vmatprep.subr.mxu0 0.0
    %146 = vmatpush2.msra.mxu0 0.0
    %147 = vmatprep.subr.mxu0 0.0
    %148 = vmatpush2.msra.mxu0 0.0
    %149 = vmatprep.subr.mxu0 0.0
    %150 = vmatpush2.msra.mxu0 0.0
    %151 = vmatprep.subr.mxu0 0.0
    %152 = vmatpush2.msra.mxu0 0.0
    %153 = vmatprep.subr.mxu0 0.0
    %154 = vmatpush2.msra.mxu0 0.0
    %155 = vmatprep.subr.mxu0 0.0
    %156 = vmatpush2.msra.mxu0 0.0
    %157 = vmatprep.subr.mxu0 0.0
    %158 = vmatpush2.msra.mxu0 0.0
    %159 = vmatprep.subr.mxu0 0.0
    %160 = vmatpush2.msra.mxu0 0.0
    %161 = vmatprep.subr.mxu0 0.0
    %162 = vmatpush2.msra.mxu0 0.0
    %163 = vmatprep.mubr.f32.mxu0 0.0
    %164 = vmatmul.mubr.f32.gmra.mxu0 %v97
    %v165 = vpop.f32.mrf.mxu0
    %v166 = vadd.f32 %v93, %v165
    %v167 = vpop.f32.mrf.mxu0
    %168 = vdwg.mxu0
    %v169 = vmax.f32 %v166, 0.0
    %v170 = vld [vmem:[%s4] sm:$0x1]
    %v172 = vlaneseq
    %v173 = vshrl.u32 %v172, 7
    %v174 = vsub.s32 0, %v173
    %v175 = vrot.slane %v170, %v174
    %177 = vmatprep.subr.mxu0 0.0
    %178 = vmatpush1.msra.mxu0 %v87
    %179 = vmatprep.subr.mxu0 0.0
    %180 = vmatpush1.msra.mxu0 %v86
    %181 = vmatprep.subr.mxu0 0.0
    %182 = vmatpush1.msra.mxu0 %v85
    %183 = vmatprep.subr.mxu0 0.0
    %184 = vmatpush1.msra.mxu0 %v84
    %185 = vmatprep.subr.mxu0 0.0
    %186 = vmatpush1.msra.mxu0 %v83
    %187 = vmatprep.subr.mxu0 0.0
    %188 = vmatpush1.msra.mxu0 %v82
    %189 = vmatprep.subr.mxu0 0.0
    %190 = vmatpush1.msra.mxu0 %v81
    %191 = vmatprep.subr.mxu0 0.0
    %192 = vmatpush1.msra.mxu0 %v80
    %193 = vmatprep.subr.mxu0 0.0
    %194 = vmatpush1.msra.mxu0 %v79
    %195 = vmatprep.subr.mxu0 0.0
    %196 = vmatpush1.msra.mxu0 %v78
    %197 = vmatprep.subr.mxu0 0.0
    %198 = vmatpush1.msra.mxu0 %v77
    %199 = vmatprep.subr.mxu0 0.0
    %200 = vmatpush1.msra.mxu0 %v76
    %201 = vmatprep.subr.mxu0 0.0
    %202 = vmatpush1.msra.mxu0 %v75
    %203 = vmatprep.subr.mxu0 0.0
    %204 = vmatpush1.msra.mxu0 %v74
    %205 = vmatprep.subr.mxu0 0.0
    %206 = vmatpush1.msra.mxu0 %v73
    %207 = vmatprep.subr.mxu0 0.0
    %208 = vmatpush1.msra.mxu0 %v72
    %209 = vmatprep.subr.mxu0 0.0
    %210 = vmatpush2.msra.mxu0 0.0
    %211 = vmatprep.subr.mxu0 0.0
    %212 = vmatpush2.msra.mxu0 0.0
    %213 = vmatprep.subr.mxu0 0.0
    %214 = vmatpush2.msra.mxu0 0.0
    %215 = vmatprep.subr.mxu0 0.0
    %216 = vmatpush2.msra.mxu0 0.0
    %217 = vmatprep.subr.mxu0 0.0
    %218 = vmatpush2.msra.mxu0 0.0
    %219 = vmatprep.subr.mxu0 0.0
    %220 = vmatpush2.msra.mxu0 0.0
    %221 = vmatprep.subr.mxu0 0.0
    %222 = vmatpush2.msra.mxu0 0.0
    %223 = vmatprep.subr.mxu0 0.0
    %224 = vmatpush2.msra.mxu0 0.0
    %225 = vmatprep.subr.mxu0 0.0
    %226 = vmatpush2.msra.mxu0 0.0
    %227 = vmatprep.subr.mxu0 0.0
    %228 = vmatpush2.msra.mxu0 0.0
    %229 = vmatprep.subr.mxu0 0.0
    %230 = vmatpush2.msra.mxu0 0.0
    %231 = vmatprep.subr.mxu0 0.0
    %232 = vmatpush2.msra.mxu0 0.0
    %233 = vmatprep.subr.mxu0 0.0
    %234 = vmatpush2.msra.mxu0 0.0
    %235 = vmatprep.subr.mxu0 0.0
    %236 = vmatpush2.msra.mxu0 0.0
    %237 = vmatprep.subr.mxu0 0.0
    %238 = vmatpush2.msra.mxu0 0.0
    %239 = vmatprep.subr.mxu0 0.0
    %240 = vmatpush2.msra.mxu0 0.0
    %241 = vmatprep.mubr.f32.mxu0 0.0
    %242 = vmatmul.mubr.f32.gmra.mxu0 %v169
    %v243 = vpop.f32.mrf.mxu0
    %v244 = vadd.f32 %v175, %v243
    %v245 = vpop.f32.mrf.mxu0
    %246 = vdwg.mxu0
    %v247 = vmax.f32 %v244, 0.0
    %v248 = vld [vmem:[%s5] sm:$0x1]
    %v250 = vlaneseq
    %v251 = vshrl.u32 %v250, 7
    %v252 = vsub.s32 0, %v251
    %v253 = vrot.slane %v248, %v252
    %v255 = vmul.f32 %v247, %v253
    %256 = vadd.xlane.f32.xlu0 %v255
    %v257 = vpop.xlane.xlu0 %256
    %v258 = vld [vmem:[#allocation2] sm:$0x1]
    %v260 = vlaneseq
    %v261 = vshrl.u32 %v260, 7
    %v262 = vsub.s32 0, %v261
    %v263 = vrot.slane %v258, %v262
    %v265 = vadd.f32 %v257, %v263
    %vm266 = vcmask 7168
    %267 = vst.msk [vmem:[%s7] sm:$0xff] %vm266, %v265
    // Predicated region
    $region42: #{tpu_custom_call.1} parent=1 // pred_check
      _
    $region43: #{tpu_custom_call.1} parent=1 // pred_check_branch
      %269 = sbr.rel (0) target = $region45
    $region44: #{tpu_custom_call.1} parent=1 // pred_region
      _
    $region45: #{tpu_custom_call.1} parent=1 // pred_fallthru
      _
    // Predicated region
    $region46: #{tpu_custom_call.1} parent=1 // pred_check
      _
    $region47: #{tpu_custom_call.1} parent=1 // pred_check_branch
      %271 = sbr.rel (0) target = $region49
    $region48: #{tpu_custom_call.1} parent=1 // pred_region
      _
    $region49: #{tpu_custom_call.1} parent=1 // pred_fallthru
      _
    %272 = vsyncpa [#allocation4], 1
    %273 = vsyncpa [#allocation6], 1

</llo_original>
